<compile_context>
chip_gen: v7x
topology: tpu7x:2x2x1
jax: 0.10.0
libtpu: 0.0.40
codegen_flags: <defaults>
</compile_context>

<pallas_src>
import functools

import numpy as np
import jax
import jax.numpy as jnp
from jax.experimental import pallas as pl
from jax.experimental.pallas import tpu as pltpu


def _round_up(x, m):
    return (x + m - 1) // m * m


# ---------------------------------------------------------------------------
# Path 1: small vocab -- VMEM-resident table, one-hot gather on the MXU.
# ---------------------------------------------------------------------------
def _embed_onehot_kernel(ids_ref, table_ref, out_ref, *, scale, vocab):
    """ids_ref: (tb, 1) int32 VMEM; table_ref: (V, E) VMEM (resident);
    out_ref: (tb, E) VMEM."""
    ids = ids_ref[...]                                          # (tb, 1)
    tb = ids.shape[0]
    cols = jax.lax.broadcasted_iota(jnp.int32, (tb, vocab), 1)  # (tb, V)
    onehot = (ids == cols).astype(table_ref.dtype)              # (tb, V)
    emb = jnp.dot(onehot, table_ref[...], preferred_element_type=jnp.float32)
    out_ref[...] = (emb * scale).astype(out_ref.dtype)


# ---------------------------------------------------------------------------
# Path 2: large vocab -- HBM row gather, cross-step double-buffered DMAs.
# ---------------------------------------------------------------------------
def _embed_gather_kernel(ids_ref, table_hbm, out_ref, buf, sems, *, scale, tb):
    """
    ids_ref:   (n_pad,)       int32 SMEM (scalar-prefetched ids, full array)
    table_hbm: (V, E_pad)     float HBM  (pl.ANY; row-DMA'd, never staged whole)
    out_ref:   (tb, E_pad)    float VMEM output tile
    buf:       (2, tb, E_pad) float VMEM double-buffered DMA landing buffer
    sems:      (2,)           DMA semaphores, one per buffer slot
    """
    i = pl.program_id(0)
    n = pl.num_programs(0)
    slot = i % 2

    def issue_block(block, into_slot):
        base = block * tb

        @pl.loop(0, tb)
        def _issue(t):
            row = ids_ref[base + t]
            pltpu.make_async_copy(
                table_hbm.at[pl.ds(row, 1), :],
                buf.at[into_slot, pl.ds(t, 1), :],
                sems.at[into_slot],
            ).start()

    # Prime the pipeline: first step issues its own block's gathers.
    @pl.when(i == 0)
    def _prime():
        issue_block(0, 0)

    # Keep the DMA engines busy: issue the NEXT block's row gathers into the
    # other slot BEFORE draining the current one.
    @pl.when(i + 1 < n)
    def _prefetch_next():
        issue_block(i + 1, 1 - slot)

    # One bulk wait: all `tb` row copies of this slot signalled the same DMA
    # semaphore; DMA semaphores count bytes, so a single descriptor sized
    # (tb, E_pad) drains exactly their combined completion.
    pltpu.make_async_copy(buf.at[1 - slot], buf.at[slot], sems.at[slot]).wait()

    # Scale in f32 (parity with an f32 reference even for bf16 tables), then
    # one large lane-dense store.
    out_ref[...] = (buf[slot].astype(jnp.float32) * scale).astype(out_ref.dtype)


# ---------------------------------------------------------------------------
# Wrapper
# ---------------------------------------------------------------------------
def word_embedding_forward(word_ids, table, *, token_block=128,
                           vmem_table_budget_bytes=4 * 1024 * 1024,
                           max_onehot_vocab=2048,
                           force_hbm_gather=False):
    """word_ids: int tensor of any shape; table: (V, E) float -> (..., E)."""
    V, E = table.shape
    scale = float(E) ** 0.5
    lead_shape = word_ids.shape
    N = int(np.prod(lead_shape))

    # Clamp ids like XLA gather does, and to keep row DMAs in-bounds.
    ids = jnp.clip(word_ids.reshape(N).astype(jnp.int32), 0, V - 1)

    # Lane-dense last dim: pad E up to a multiple of 128 so the (tb, E) output
    # stores are unmasked vst and row DMAs are >=512 B aligned.
    E_pad = _round_up(E, 128)
    tbl = table if E_pad == E else jnp.pad(table, ((0, 0), (0, E_pad - E)))
    itemsize = jnp.dtype(table.dtype).itemsize

    # Token block: multiple of 8, clamped for tiny inputs, and split so the
    # grid has >= 2 steps when possible (pipeline warm-up / megacore).
    tb = max(8, _round_up(min(token_block, _round_up(N, 8)), 8))
    if N > 8 and _round_up(N, tb) // tb < 2:
        tb = max(8, _round_up((tb + 1) // 2, 8))
    n_pad = _round_up(N, tb)
    if n_pad != N:
        ids = jnp.concatenate([ids, jnp.zeros((n_pad - N,), jnp.int32)])
    num_blocks = n_pad // tb

    table_bytes = V * E_pad * itemsize
    use_vmem_path = (not force_hbm_gather
                     and table_bytes <= vmem_table_budget_bytes
                     and V <= max_onehot_vocab)

    if use_vmem_path:
        kernel = functools.partial(_embed_onehot_kernel, scale=scale, vocab=V)
        out_flat = pl.pallas_call(
            kernel,
            out_shape=jax.ShapeDtypeStruct((n_pad, E_pad), table.dtype),
            grid=(num_blocks,),
            in_specs=[
                pl.BlockSpec((tb, 1), lambda i: (i, 0)),        # token ids
                pl.BlockSpec((V, E_pad), lambda i: (0, 0)),     # resident table
            ],
            out_specs=pl.BlockSpec((tb, E_pad), lambda i: (i, 0)),
            compiler_params=pltpu.CompilerParams(
                dimension_semantics=("parallel",)),
            cost_estimate=pl.CostEstimate(
                flops=2 * n_pad * V * E_pad + n_pad * E_pad,
                transcendentals=0,
                bytes_accessed=(V * E_pad + n_pad * E_pad) * itemsize + n_pad * 4,
            ),
        )(ids.reshape(n_pad, 1), tbl)
    else:
        # TODO(synk): for very long sequences, block the ids instead of
        # scalar-prefetching the whole array into SMEM.
        kernel = functools.partial(_embed_gather_kernel, scale=scale, tb=tb)
        out_flat = pl.pallas_call(
            kernel,
            out_shape=jax.ShapeDtypeStruct((n_pad, E_pad), table.dtype),
            grid_spec=pltpu.PrefetchScalarGridSpec(
                num_scalar_prefetch=1,                          # ids -> SMEM
                grid=(num_blocks,),
                in_specs=[pl.BlockSpec(memory_space=pl.ANY)],   # table stays HBM
                out_specs=pl.BlockSpec((tb, E_pad), lambda i, ids: (i, 0)),
                scratch_shapes=[
                    pltpu.VMEM((2, tb, E_pad), table.dtype),    # double buffer
                    pltpu.SemaphoreType.DMA((2,)),              # one sem / slot
                ],
            ),
            compiler_params=pltpu.CompilerParams(
                # Cross-step DMA pipeline carries state in scratch, so the
                # axis is not megacore-partitionable.
                dimension_semantics=("arbitrary",)),
            cost_estimate=pl.CostEstimate(
                flops=n_pad * E_pad,                            # sqrt(E) scale
                transcendentals=0,
                bytes_accessed=2 * n_pad * E_pad * itemsize + n_pad * 4,
            ),
        )(ids, tbl)

    return out_flat[:N, :E].reshape(*lead_shape, E)


if __name__ == "__main__":
    # Deterministic synthetic setup (mirrors WordEmbedding.__init__).
    vocab_size = 64
    embedding_size = 128      # lane-dense last dim
    B, S = 2, 8

    key = jax.random.PRNGKey(0)
    k_w, k_ids = jax.random.split(key)

    # weight.data.normal_(0.0, E ** -0.5) -- overwrites the padding row too,
    # matching the PyTorch module's init order.
    table = (jax.random.normal(k_w, (vocab_size, embedding_size), jnp.float32)
             * (embedding_size ** -0.5))
    word_ids = jax.random.randint(k_ids, (B, S), 0, vocab_size, dtype=jnp.int32)

    ref = jnp.take(table, word_ids, axis=0) * (embedding_size ** 0.5)

    # Path 1: VMEM-resident table + one-hot MXU gather (small vocab).
    out_fast = jax.block_until_ready(word_embedding_forward(word_ids, table))
    assert out_fast.shape == (B, S, embedding_size)
    assert np.allclose(np.asarray(out_fast), np.asarray(ref), atol=1e-5, rtol=1e-5)

    # Path 2: HBM-resident table + cross-step double-buffered row-DMA gather.
    out_gather = jax.block_until_ready(
        word_embedding_forward(word_ids, table, force_hbm_gather=True))
    assert out_gather.shape == (B, S, embedding_size)
    assert np.allclose(np.asarray(out_gather), np.asarray(ref), atol=1e-5, rtol=1e-5)

    print("KERNEL_OK")
</pallas_src>

<mosaic_0001>
module attributes {stable_mosaic.version = 11 : i64} {
  func.func @_embed_onehot_kernel(%arg0: i32, %arg1: memref<8x1xi32, #tpu.memory_space<vmem>>, %arg2: memref<64x128xf32, #tpu.memory_space<vmem>>, %arg3: memref<8x128xf32, #tpu.memory_space<vmem>>) attributes {dimension_semantics = [#tpu.dimension_semantics<parallel>], iteration_bounds = array<i64: 2>, scalar_prefetch = 0 : i64, scratch_operands = 0 : i64, tpu.core_type = #tpu.core_type<tc>, window_params = [{transform_indices = @transform_0, window_bounds = array<i64: 8, 1>}, {pipeline_mode = #tpu.pipeline_mode<synchronous>, transform_indices = @transform_1, window_bounds = array<i64: 64, 128>}, {transform_indices = @transform_2, window_bounds = array<i64: 8, 128>}]} {
    %c0 = arith.constant 0 : index
    %c0_0 = arith.constant 0 : index
    %0 = vector.load %arg1[%c0, %c0_0] : memref<8x1xi32, #tpu.memory_space<vmem>>, vector<8x1xi32>
    %1 = tpu.iota {dimensions = array<i32: 1>} : vector<8x64xi32>
    %2 = vector.broadcast %0 : vector<8x1xi32> to vector<8x64xi32>
    %3 = arith.cmpi eq, %2, %1 : vector<8x64xi32>
    %4 = arith.extui %3 : vector<8x64xi1> to vector<8x64xi32>
    %5 = arith.sitofp %4 : vector<8x64xi32> to vector<8x64xf32>
    %c0_1 = arith.constant 0 : index
    %c0_2 = arith.constant 0 : index
    %6 = vector.load %arg2[%c0_1, %c0_2] : memref<64x128xf32, #tpu.memory_space<vmem>>, vector<64x128xf32>
    %cst = arith.constant dense<0.000000e+00> : vector<8x128xf32>
    %7 = tpu.matmul %5, %6, %cst {dimension_numbers = #tpu.dot_dimension_numbers<[1], [0], [0], [1], [0, 0, 1, 1], [], []>} : vector<8x64xf32>, vector<64x128xf32>, vector<8x128xf32> -> vector<8x128xf32>
    %cst_3 = arith.constant 11.3137083 : f32
    %8 = vector.broadcast %cst_3 : f32 to vector<8x128xf32>
    %9 = arith.mulf %7, %8 : vector<8x128xf32>
    %c0_4 = arith.constant 0 : index
    %c0_5 = arith.constant 0 : index
    %10 = vector.load %arg3[%c0_4, %c0_5] : memref<8x128xf32, #tpu.memory_space<vmem>>, vector<8x128xf32>
    tpu.vector_store %arg3[%c0_4, %c0_5], %9 {strides = array<i32>} : memref<8x128xf32, #tpu.memory_space<vmem>>, vector<8x128xf32>,
    return
  }
  func.func @transform_0(%arg0: i32) -> (i32, i32) {
    %c0_i32 = arith.constant 0 : i32
    %c0_i32_0 = arith.constant 0 : i32
    return %arg0, %c0_i32 : i32, i32
  }
  func.func @transform_1(%arg0: i32) -> (i32, i32) {
    %c0_i32 = arith.constant 0 : i32
    %c0_i32_0 = arith.constant 0 : i32
    %c0_i32_1 = arith.constant 0 : i32
    return %c0_i32, %c0_i32_0 : i32, i32
  }
  func.func @transform_2(%arg0: i32) -> (i32, i32) {
    %c0_i32 = arith.constant 0 : i32
    %c0_i32_0 = arith.constant 0 : i32
    return %arg0, %c0_i32 : i32, i32
  }
}

</mosaic_0001>

<llo_original>
// kernel: tpu_custom_call.1
$region0: #{tpu_custom_call.1}
  #allocation0 [shape = 'u32[]', space=smem, size = 0x4, offset = 0x4, fixed_abs, tag = 'smem constant byte address 0x4 - core index']
  #allocation1 [shape = 'u32[144,128]{1,0:T(1,128)}', space=vmem, size = 0x12000, scoped, tag = 'internal scratch']
  %s0 = inlined_call_operand.vmem [shape: s32[16,1], index: 0, kind: input, shape index: {}]
  %s1 = inlined_call_operand.hbm [shape: f32[64,128], index: 1, kind: input, shape index: {}]
  %s2 = inlined_call_operand.hbm [shape: f32[16,128], index: 2, kind: output, shape index: {}]
  %s3 = sld [smem:[#allocation0]]
  $region45: #{tpu_custom_call.1} parent=0
    _
  %s5 = ssub.s32 1, %s3
  %s6 = scalar_select 0, %s5, %s3
  $region1: #{tpu_custom_call.1} parent=0
    #allocation2 [shape = 'u8[32768]{0}', space=vmem, size = 0x8000, scoped, tag = 'input window, operand 1, single buffered']
    #allocation3 [shape = 's32[2]{0}', space=sflag, size = 0x8, scoped, tag = 'scoped memory for tpu_custom_call.1']
    #allocation4 [shape = 's32[2]{0}', space=sflag, size = 0x8, scoped, tag = 'scoped memory for tpu_custom_call.1']
    #allocation5 [shape = 'u8[8192]{0}', space=vmem, size = 0x2000, scoped, tag = 'output window, operand 0']
    %7 = vsyncpa [#allocation3], 0
    %8 = vsyncpa [#allocation4], 0
    %s9 = scalar_lea.sflag [#allocation4], 1
    %10 = vsyncpa %s9, 0
    loop: start=0, step=1, limit=4
    $region2: #{tpu_custom_call.1} parent=1 // loop_pre_header
      _
    $region3: #{tpu_custom_call.1} parent=1 // loop_header
      %s12 = sphi 0, %s16
      %p13 = scmp.ge.s32.totalorder %s12, 4
      %s22 = sphi 0, %s24
      %s25 = sphi 0, %s22
      %s26 = sphi 0, %s25
      %s42 = sphi 0, %s26
      %s46 = sphi 0, %s46
      %s48 = sphi 0, %s46
      %s49 = sphi 0, %s48
      %s63 = sphi 0, %s49
      %s69 = sphi 0, %s71
      %s72 = sphi 0, %s69
      %s73 = sphi 0, %s72
      %s89 = sphi 0, %s73
    $region4: #{tpu_custom_call.1} parent=1 // loop_header_branch
      %15 = sbr.rel (%p13) target = $region8
    $region5: #{tpu_custom_call.1} parent=1 // loop_body
      %s17 = ssub.s32 %s12, 1
      %s18 = ssub.s32 %s12, 2
      %s19 = sadd.s32 %s12, 1
      %s20 = ssub.s32 %s12, %s19
      %p21 = scmp.eq.s32.totalorder %s20, 0
      %s23 = sadd.s32 %s22, 1
      %s24 = scalar_select %p21, %s22, %s23
      %p27 = pneg %p21
      %p28 = scmp.eq.s32.totalorder %s12, 1
      %p29 = por %p27, %p28
      %p30 = scmp.ne.s32.totalorder %s22, %s25
      %p31 = scmp.eq.s32.totalorder %s12, 0
      %p32 = por %p30, %p31
      %p33 = scmp.ne.s32.totalorder %s22, %s25
      %p34 = scmp.eq.s32.totalorder %s17, 1
      %p35 = por %p33, %p34
      %p36 = scmp.ne.s32.totalorder %s25, %s26
      %p37 = scmp.eq.s32.totalorder %s17, 0
      %p38 = por %p36, %p37
      %p39 = scmp.ne.s32.totalorder %s25, %s26
      %p40 = scmp.eq.s32.totalorder %s18, 1
      %p41 = por %p39, %p40
      %p43 = scmp.ne.s32.totalorder %s26, %s42
      %p44 = scmp.eq.s32.totalorder %s18, 0
      %p45 = por %p43, %p44
      %s47 = sadd.s32 %s46, 1
      %p50 = scmp.eq.s32.totalorder %s12, 1
      %p51 = scmp.ne.s32.totalorder %s46, %s48
      %p52 = scmp.eq.s32.totalorder %s12, 0
      %p53 = por %p51, %p52
      %p54 = scmp.ne.s32.totalorder %s46, %s48
      %p55 = scmp.eq.s32.totalorder %s17, 1
      %p56 = por %p54, %p55
      %p57 = scmp.ne.s32.totalorder %s48, %s49
      %p58 = scmp.eq.s32.totalorder %s17, 0
      %p59 = por %p57, %p58
      %p60 = scmp.ne.s32.totalorder %s48, %s49
      %p61 = scmp.eq.s32.totalorder %s18, 1
      %p62 = por %p60, %p61
      %p64 = scmp.ne.s32.totalorder %s49, %s63
      %p65 = scmp.eq.s32.totalorder %s18, 0
      %p66 = por %p64, %p65
      %s67 = ssub.s32 %s12, %s19
      %p68 = scmp.eq.s32.totalorder %s67, 0
      %s70 = sadd.s32 %s69, 1
      %s71 = scalar_select %p68, %s69, %s70
      %p74 = pneg %p68
      %p75 = scmp.eq.s32.totalorder %s12, 1
      %p76 = por %p74, %p75
      %p77 = scmp.ne.s32.totalorder %s69, %s72
      %p78 = scmp.eq.s32.totalorder %s12, 0
      %p79 = por %p77, %p78
      %p80 = scmp.ne.s32.totalorder %s69, %s72
      %p81 = scmp.eq.s32.totalorder %s17, 1
      %p82 = por %p80, %p81
      %p83 = scmp.ne.s32.totalorder %s72, %s73
      %p84 = scmp.eq.s32.totalorder %s17, 0
      %p85 = por %p83, %p84
      %p86 = scmp.ne.s32.totalorder %s72, %s73
      %p87 = scmp.eq.s32.totalorder %s18, 1
      %p88 = por %p86, %p87
      %p90 = scmp.ne.s32.totalorder %s73, %s89
      %p91 = scmp.eq.s32.totalorder %s18, 0
      %p92 = por %p90, %p91
      %p93 = scmp.le.s32.totalorder 1, %s12
      %p94 = scmp.lt.s32.totalorder %s12, 3
      %p95 = pnand %p93, %p94
      %p96 = pneg %p95
      // Predicated region
      $region9: #{tpu_custom_call.1} parent=5 // pred_check
        _
      $region10: #{tpu_custom_call.1} parent=5 // pred_check_branch
        %98 = sbr.rel (%p95) target = $region12
      $region11: #{tpu_custom_call.1} parent=5 // pred_region
        %s99 = ssub.s32 %s12, 1
        // Predicated region
        $region13: #{tpu_custom_call.1} parent=11 // pred_check
          %p100 = pneg %p59
        $region14: #{tpu_custom_call.1} parent=11 // pred_check_branch
          %102 = sbr.rel (%p100) target = $region16
        $region15: #{tpu_custom_call.1} parent=11 // pred_region
          %s104 = ssub.s32 1024, 1024
          %105 = vsyncadd [#allocation3], %s104
          %s106 = sshll.u32 [#allocation2], 4
          %s107 = int_to_ptr.vmem [resolvable:$true] %s106
          %112 = dma.hbm_to_vmem [thread:$0]  %s1, 1024, %s107, [#allocation3], 128, 128, 8
        $region16: #{tpu_custom_call.1} parent=11 // pred_fallthru
          _
      $region12: #{tpu_custom_call.1} parent=5 // pred_fallthru
        _
      %p113 = scmp.lt.s32.totalorder %s12, 2
      // Predicated region
      $region17: #{tpu_custom_call.1} parent=5 // pred_check
        %p114 = pneg %p113
      $region18: #{tpu_custom_call.1} parent=5 // pred_check_branch
        %116 = sbr.rel (%p114) target = $region20
      $region19: #{tpu_custom_call.1} parent=5 // pred_region
        // Predicated region
        $region21: #{tpu_custom_call.1} parent=19 // pred_check
          %p117 = pneg %p32
        $region22: #{tpu_custom_call.1} parent=19 // pred_check_branch
          %119 = sbr.rel (%p117) target = $region24
        $region23: #{tpu_custom_call.1} parent=19 // pred_region
          %p120 = scmp.lt.s32.totalorder %s12, 1
          %s121 = scalar_select %p120, %s12, 1
          %s122 = smul.addr %s121, 8
          %s123 = scalar_lea.vmem %s0, %s122
        $region24: #{tpu_custom_call.1} parent=19 // pred_fallthru
          _
      $region20: #{tpu_custom_call.1} parent=5 // pred_fallthru
        _
      %p124 = scmp.le.s32.totalorder 1, %s12
      %p125 = scmp.lt.s32.totalorder %s12, 3
      %p126 = pnand %p124, %p125
      %p127 = pneg %p126
      // Predicated region
      $region25: #{tpu_custom_call.1} parent=5 // pred_check
        _
      $region26: #{tpu_custom_call.1} parent=5 // pred_check_branch
        %129 = sbr.rel (%p126) target = $region28
      $region27: #{tpu_custom_call.1} parent=5 // pred_region
        %s130 = ssub.s32 %s12, 1
        // Predicated region
        $region29: #{tpu_custom_call.1} parent=27 // pred_check
          %p131 = pneg %p59
        $region30: #{tpu_custom_call.1} parent=27 // pred_check_branch
          %133 = sbr.rel (%p131) target = $region32
        $region31: #{tpu_custom_call.1} parent=27 // pred_region
          %134 = dma.done [#allocation3], 1024
        $region32: #{tpu_custom_call.1} parent=27 // pred_fallthru
          _
        %p135 = scmp.lt.s32.totalorder %s17, 1
        %s136 = scalar_select %p135, %s17, 1
        %s137 = smul.addr %s136, 8
        %s138 = scalar_lea.vmem %s0, %s137
        %p139 = pneg %p38
        %p140 = pneg %p35
        %p141 = pneg %p59
        %p142 = pneg %p56
        %p143 = pneg %p85
        %p144 = pneg %p82
        %s145 = sand.u32 %s72, 1
        %s146 = scalar_lea.sflag [#allocation4], %s145
        %s147 = sand.u32 %s72, 1
        %s148 = smul.addr %s147, 8
        %s149 = scalar_lea.vmem [#allocation5], %s148
        %p150 = scmp.lt.s32.totalorder %s17, 1
        %s151 = scalar_select %p150, %s17, 1
        %s152 = smul.addr %s151, 8
        %s153 = scalar_lea.vmem %s0, %s152
        %v154 = vld [vmem:[%s153] sm:$0xff]
        %v155 = vlaneseq
        %v156 = vand.u32 %v155, 127
        %157 = vset.pattern.permute.xlu0 0
        %158 = vperm.xlu0 %157, %v154
        %v159 = vpop.permute.xlu0 %158
        %vm160 = vcmp.eq.s32.totalorder %v159, %v156
        %v161 = vsel %vm160, 1, 0
        %v162 = vcvt.s32.f32 %v161
        %v163 = vld [vmem:[#allocation2] sm:$0xff]
        %v164 = vld [vmem:[#allocation2 + $0x8] sm:$0xff]
        %v165 = vld [vmem:[#allocation2 + $0x10] sm:$0xff]
        %v166 = vld [vmem:[#allocation2 + $0x18] sm:$0xff]
        %v167 = vld [vmem:[#allocation2 + $0x20] sm:$0xff]
        %v168 = vld [vmem:[#allocation2 + $0x28] sm:$0xff]
        %v169 = vld [vmem:[#allocation2 + $0x30] sm:$0xff]
        %v170 = vld [vmem:[#allocation2 + $0x38] sm:$0xff]
        %vm171 = vcmask 523264
        %v173 = vsel %vm171, %v162, 0
        %175 = vmatprep.subr.mxu0 0.0
        %176 = vmatpush1.msra.mxu0 %v163
        %177 = vmatprep.subr.mxu0 0.0
        %178 = vmatpush1.msra.mxu0 %v164
        %179 = vmatprep.subr.mxu0 0.0
        %180 = vmatpush1.msra.mxu0 %v165
        %181 = vmatprep.subr.mxu0 0.0
        %182 = vmatpush1.msra.mxu0 %v166
        %183 = vmatprep.subr.mxu0 0.0
        %184 = vmatpush1.msra.mxu0 %v167
        %185 = vmatprep.subr.mxu0 0.0
        %186 = vmatpush1.msra.mxu0 %v168
        %187 = vmatprep.subr.mxu0 0.0
        %188 = vmatpush1.msra.mxu0 %v169
        %189 = vmatprep.subr.mxu0 0.0
        %190 = vmatpush1.msra.mxu0 %v170
        %191 = vmatprep.subr.mxu0 0.0
        %192 = vmatpush1.msra.mxu0 0.0
        %193 = vmatprep.subr.mxu0 0.0
        %194 = vmatpush1.msra.mxu0 0.0
        %195 = vmatprep.subr.mxu0 0.0
        %196 = vmatpush1.msra.mxu0 0.0
        %197 = vmatprep.subr.mxu0 0.0
        %198 = vmatpush1.msra.mxu0 0.0
        %199 = vmatprep.subr.mxu0 0.0
        %200 = vmatpush1.msra.mxu0 0.0
        %201 = vmatprep.subr.mxu0 0.0
        %202 = vmatpush1.msra.mxu0 0.0
        %203 = vmatprep.subr.mxu0 0.0
        %204 = vmatpush1.msra.mxu0 0.0
        %205 = vmatprep.subr.mxu0 0.0
        %206 = vmatpush1.msra.mxu0 0.0
        %207 = vmatprep.subr.mxu0 0.0
        %208 = vmatpush1.msra.mxu0 0.0
        %209 = vmatprep.subr.mxu0 0.0
        %210 = vmatpush1.msra.mxu0 0.0
        %211 = vmatprep.subr.mxu0 0.0
        %212 = vmatpush1.msra.mxu0 0.0
        %213 = vmatprep.subr.mxu0 0.0
        %214 = vmatpush1.msra.mxu0 0.0
        %215 = vmatprep.subr.mxu0 0.0
        %216 = vmatpush1.msra.mxu0 0.0
        %217 = vmatprep.subr.mxu0 0.0
        %218 = vmatpush1.msra.mxu0 0.0
        %219 = vmatprep.subr.mxu0 0.0
        %220 = vmatpush1.msra.mxu0 0.0
        %221 = vmatprep.subr.mxu0 0.0
        %222 = vmatpush1.msra.mxu0 0.0
        %223 = vmatprep.subr.mxu0 0.0
        %224 = vmatpush1.msra.mxu0 0.0
        %225 = vmatprep.subr.mxu0 0.0
        %226 = vmatpush1.msra.mxu0 0.0
        %227 = vmatprep.subr.mxu0 0.0
        %228 = vmatpush1.msra.mxu0 0.0
        %229 = vmatprep.subr.mxu0 0.0
        %230 = vmatpush1.msra.mxu0 0.0
        %231 = vmatprep.subr.mxu0 0.0
        %232 = vmatpush1.msra.mxu0 0.0
        %233 = vmatprep.subr.mxu0 0.0
        %234 = vmatpush1.msra.mxu0 0.0
        %235 = vmatprep.subr.mxu0 0.0
        %236 = vmatpush1.msra.mxu0 0.0
        %237 = vmatprep.subr.mxu0 0.0
        %238 = vmatpush1.msra.mxu0 0.0
        %239 = vmatprep.mubr.f32.mxu0 0.0
        %240 = vmatmul.mubr.f32.gmra.mrb[0].mxu0 %v173
        %v241 = vpop.f32.mrb[0].mxu0
        %v242 = vadd.f32 0.0, %v241
        %v243 = vpop.f32.mrb[0].mxu0
        %244 = vdwg.mxu0
        %v245 = vmul.f32 %v242, 11.313708
        %246 = vst [vmem:[%s149] sm:$0xff] %v245
        %s247 = sand.u32 %s72, 1
        %s248 = scalar_lea.sflag [#allocation4], %s247
        %s249 = sand.u32 %s72, 1
        %s250 = smul.addr %s249, 8
        %s251 = scalar_lea.vmem [#allocation5], %s250
        // Predicated region
        $region33: #{tpu_custom_call.1} parent=27 // pred_check
          %p252 = pneg %p82
        $region34: #{tpu_custom_call.1} parent=27 // pred_check_branch
          %254 = sbr.rel (%p252) target = $region36
        $region35: #{tpu_custom_call.1} parent=27 // pred_region
          %s256 = ssub.s32 128, 128
          %257 = vsyncadd %s248, %s256
          %s258 = smul.addr %s17, 128
          %s259 = scalar_lea.hbm %s2, %s258
          %s261 = sshll.u32 %s251, 4
          %s262 = int_to_ptr.vmem [resolvable:$true] %s261
          %264 = dma.vmem_to_hbm [thread:$0]  %s262, 128, %s259, %s248
        $region36: #{tpu_custom_call.1} parent=27 // pred_fallthru
          _
      $region28: #{tpu_custom_call.1} parent=5 // pred_fallthru
        _
      %p265 = scmp.le.s32.totalorder 2, %s12
      // Predicated region
      $region37: #{tpu_custom_call.1} parent=5 // pred_check
        %p266 = pneg %p265
      $region38: #{tpu_custom_call.1} parent=5 // pred_check_branch
        %268 = sbr.rel (%p266) target = $region40
      $region39: #{tpu_custom_call.1} parent=5 // pred_region
        %s269 = ssub.s32 %s12, 2
        // Predicated region
        $region41: #{tpu_custom_call.1} parent=39 // pred_check
          %p270 = pneg %p88
        $region42: #{tpu_custom_call.1} parent=39 // pred_check_branch
          %272 = sbr.rel (%p270) target = $region44
        $region43: #{tpu_custom_call.1} parent=39 // pred_region
          %s273 = sand.u32 %s73, 1
          %s274 = scalar_lea.sflag [#allocation4], %s273
          %s275 = sand.u32 %s73, 1
          %s276 = smul.addr %s275, 8
          %s277 = scalar_lea.vmem [#allocation5], %s276
          %278 = dma.done %s274, 128
        $region44: #{tpu_custom_call.1} parent=39 // pred_fallthru
          _
      $region40: #{tpu_custom_call.1} parent=5 // pred_fallthru
        _
    $region6: #{tpu_custom_call.1} parent=1 // loop_footer
      %s16 = sadd.s32 1, %s12
    $region7: #{tpu_custom_call.1} parent=1 // loop_footer_branch
      %11 = sbr.rel target = $region3
    $region8: #{tpu_custom_call.1} parent=1 // loop_exit
      _
    %279 = vsyncpa [#allocation3], 1
    %s280 = scalar_lea.sflag [#allocation3], 1
    %281 = vsyncpa %s280, 1
    %282 = vsyncpa [#allocation4], 1
    %s283 = scalar_lea.sflag [#allocation4], 1
    %284 = vsyncpa %s283, 1

</llo_original>
